<compile_context>
chip_gen: v6e
topology: v6e:2x2x1
jax: 0.10.0
libtpu: 0.0.40
codegen_flags: <defaults>
</compile_context>

<pallas_src>
import jax
import jax.numpy as jnp
from jax.experimental import pallas as pl
from jax.experimental.pallas import tpu as pltpu

_LANES = 128


def _cdiv(a, b):
    return -(-a // b)


def _round_up(x, m):
    return _cdiv(x, m) * m


def _vmem_capacity_bytes():
    """Best-effort physical VMEM size; conservative (v7x, 64 MiB) fallback."""
    try:
        info = pltpu.get_tpu_info()
        cap = getattr(info, "vmem_capacity_bytes", None)
        if cap:
            return int(cap)
    except Exception:
        pass
    return 64 * 1024 * 1024


# ---------------------------------------------------------------------------
# Fused kernel: im2col conv + mask + max-pool + bias + ReLU + FC for one batch tile.
# ---------------------------------------------------------------------------
def _textcnn_kernel(emb_ref, w_ref, mask_ref, cb_ref, fcw_ref, fcb_ref, out_ref):
    TB, S, E = emb_ref.shape
    KE, C_pad = w_ref.shape
    max_win = KE // E
    M = TB * S

    # Flatten batch*seq so the conv is one long-M matmul (keeps the MXU streaming).
    emb2 = emb_ref[...].reshape(M, E)                    # (M, E) bf16, read from HBM once

    # im2col along K: concat the k-shifted sequences along the feature axis.
    # rolled[r] == emb2[(r + k) % M]; any wrapped / cross-batch row only lands in
    # positions the validity mask sends to -1e30, so results are exact.
    # Rolls are done on a 32-bit view (robust sublane rotate path), cast back to bf16.
    emb2_f32 = emb2.astype(jnp.float32)
    parts = [emb2]
    for k in range(1, max_win):                          # static unrolled window loop
        rolled = pltpu.roll(emb2_f32, shift=M - k, axis=0)
        parts.append(rolled.astype(jnp.bfloat16))
    im2col = jnp.concatenate(parts, axis=-1)             # (M, max_win*E) bf16

    # Single matmul: window accumulation happens inside the MXU (K = max_win*E).
    acc = jnp.dot(im2col, w_ref[...], preferred_element_type=jnp.float32)  # (M, C_pad)
    acc = acc.reshape(TB, S, C_pad)

    # Additive validity mask (0 for l < L_i of each branch, -1e30 otherwise), time max-pool.
    pooled = jnp.max(acc + mask_ref[...], axis=1)        # (TB, C_pad)

    # Bias + ReLU AFTER the pool (exactly equivalent, S-fold less elementwise work).
    pooled = jnp.maximum(pooled + cb_ref[...], 0.0)

    # TODO(synk): nn.Dropout(0.5) is stochastic; treated as identity (eval mode).

    # Fused FC: bf16 operands, f32 accumulation; zero-padded rows/cols absorb C_pad/N_pad.
    out_ref[...] = (
        jnp.dot(pooled.astype(jnp.bfloat16), fcw_ref[...],
                preferred_element_type=jnp.float32)
        + fcb_ref[...]
    )


# ---------------------------------------------------------------------------
# Wrapper: pack weights lane-dense (im2col layout), pick a batch tile, launch.
# ---------------------------------------------------------------------------
def textcnn_forward(params, token_ids, *, batch_tile=None, vmem_budget_bytes=None):
    wins = tuple(params["kernel_wins"])
    emb_table = params["embed"]
    conv_w, conv_b = params["conv_w"], params["conv_b"]
    fc_w, fc_b = params["fc_w"], params["fc_b"]

    B, S = token_ids.shape
    E = emb_table.shape[1]
    C = conv_w[0].shape[-1]
    n_win = len(wins)
    max_win = max(wins)
    assert S >= max_win, "sequence length must be >= the widest conv window"
    num_class = fc_w.shape[-1]

    C_total = n_win * C
    C_pad = _round_up(C_total, _LANES)                   # lane-dense channel axis
    N_pad = _round_up(num_class, _LANES)                 # lane-dense output / FC N
    KE = max_win * E

    # Pack all conv branches into one im2col weight, bias and additive validity mask.
    w_comb = jnp.zeros((KE, C_pad), jnp.float32)
    b_comb = jnp.zeros((1, C_pad), jnp.float32)
    mask = jnp.zeros((S, C_pad), jnp.float32)            # 0 valid / -1e30 invalid
    row = jnp.arange(S)[:, None]
    for i, win in enumerate(wins):
        for k in range(win):
            w_comb = w_comb.at[k * E:(k + 1) * E, i * C:(i + 1) * C].set(conv_w[i][k])
        b_comb = b_comb.at[:, i * C:(i + 1) * C].set(conv_b[i])
        L = S - win + 1                                  # valid length of this branch
        col = jnp.where(row < L, 0.0, -1e30)             # (S, 1)
        mask = mask.at[:, i * C:(i + 1) * C].set(jnp.broadcast_to(col, (S, C)))
    w_comb = w_comb.astype(jnp.bfloat16)                 # bf16 MXU operand, f32 acc

    fc_w_pad = (jnp.zeros((C_pad, N_pad), jnp.float32)
                .at[:C_total, :num_class].set(fc_w).astype(jnp.bfloat16))
    fc_b_pad = jnp.zeros((1, N_pad), jnp.float32).at[:, :num_class].set(fc_b)

    # Embedding lookup (gather) kept in plain JAX; the kernel reads the bf16 result once.
    # TODO(synk): fuse the gather into the kernel (scalar-prefetch token_ids + in-kernel
    # row gather) to drop the extra (B,S,E) HBM round-trip; biggest remaining win on v5e.
    emb_x = emb_table[token_ids].astype(jnp.bfloat16)    # (B, S, E)

    # ---- generation-aware VMEM budget & batch-tile selection ----
    vmem_cap = _vmem_capacity_bytes()
    if vmem_budget_bytes is None:
        vmem_budget_bytes = vmem_cap // 2                # 64 MiB on v5e/v6e, 32 MiB on v7x
    weight_bytes = (KE * C_pad * 2 + S * C_pad * 4 + C_pad * 4
                    + C_pad * N_pad * 2 + N_pad * 4)
    if batch_tile is None:
        bytes_per_row = (
            2 * S * E * 2                # double-buffered bf16 emb input block
            + S * E * 4                  # f32 upcast used by the rolls
            + 2 * S * KE * 2             # bf16 shifted parts + concatenated im2col
            + 2 * S * C_pad * 4          # f32 conv result + masked temp
            + 2 * N_pad * 4              # double-buffered output block
        )
        avail = max(vmem_budget_bytes - 2 * weight_bytes, bytes_per_row * 8)
        batch_tile = max(8, (avail // bytes_per_row) // 8 * 8)

    # Keep several grid steps when the batch allows it (DMA/compute overlap + 2 TCs on
    # v7x) and derive TB from cdiv(B, n_steps) so batch padding stays small.
    if B >= 64:
        min_steps = 4
    elif B >= 16:
        min_steps = 2
    else:
        min_steps = 1
    n_steps = max(min_steps, _cdiv(B, batch_tile))
    TB = min(_round_up(_cdiv(B, n_steps), 8), _round_up(B, 8))
    grid_steps = _cdiv(B, TB)
    B_pad = grid_steps * TB
    if B_pad != B:
        emb_x = jnp.pad(emb_x, ((0, B_pad - B), (0, 0), (0, 0)))

    vmem_limit = int(min(vmem_cap * 3 // 4, 96 * 1024 * 1024))

    out = pl.pallas_call(
        _textcnn_kernel,
        out_shape=jax.ShapeDtypeStruct((B_pad, N_pad), jnp.float32),
        grid=(grid_steps,),
        in_specs=[
            pl.BlockSpec((TB, S, E), lambda i: (i, 0, 0)),      # batch-tiled embeddings
            pl.BlockSpec((KE, C_pad), lambda i: (0, 0)),        # resident im2col conv weight
            pl.BlockSpec((S, C_pad), lambda i: (0, 0)),         # validity mask bias
            pl.BlockSpec((1, C_pad), lambda i: (0, 0)),         # conv bias
            pl.BlockSpec((C_pad, N_pad), lambda i: (0, 0)),     # FC weight (bf16)
            pl.BlockSpec((1, N_pad), lambda i: (0, 0)),         # FC bias
        ],
        out_specs=pl.BlockSpec((TB, N_pad), lambda i: (i, 0)),  # lane-dense output block
        compiler_params=pltpu.CompilerParams(
            dimension_semantics=("parallel",),                  # shard batch across TCs
            vmem_limit_bytes=vmem_limit,
        ),
    )(emb_x, w_comb, mask, b_comb, fc_w_pad, fc_b_pad)
    return out[:B, :num_class]


# ---------------------------------------------------------------------------
# Pure-JAX reference (mirrors the PyTorch forward, eval mode) for a sanity check.
# ---------------------------------------------------------------------------
def textcnn_reference(params, token_ids):
    emb = params["embed"][token_ids]                     # (B, S, E) f32
    S = token_ids.shape[1]
    pooled = []
    for i, win in enumerate(params["kernel_wins"]):
        w = params["conv_w"][i]                          # (win, E, C)
        b = params["conv_b"][i]                          # (1, C)
        L = S - win + 1
        conv = sum(
            jnp.einsum("ble,ec->blc", emb[:, k:k + L, :], w[k]) for k in range(win)
        ) + b[:, None, :]
        pooled.append(jnp.max(jax.nn.relu(conv), axis=1))
    fc_x = jnp.concatenate(pooled, axis=1)
    return fc_x @ params["fc_w"] + params["fc_b"]


def init_params(key, vocab_size, emb_dim, dim_channel, kernel_wins, num_class):
    keys = jax.random.split(key, 3 + 2 * len(kernel_wins))
    params = {
        "kernel_wins": tuple(kernel_wins),
        "embed": jax.random.normal(keys[0], (vocab_size, emb_dim), jnp.float32) * 0.1,
        "conv_w": [],
        "conv_b": [],
        "fc_w": jax.random.normal(
            keys[1], (len(kernel_wins) * dim_channel, num_class), jnp.float32) * 0.1,
        "fc_b": jax.random.normal(keys[2], (1, num_class), jnp.float32) * 0.1,
    }
    for i, w in enumerate(kernel_wins):
        params["conv_w"].append(
            jax.random.normal(keys[3 + 2 * i], (w, emb_dim, dim_channel), jnp.float32)
            * 0.1)
        params["conv_b"].append(
            jax.random.normal(keys[4 + 2 * i], (1, dim_channel), jnp.float32) * 0.1)
    return params


if __name__ == "__main__":
    # Small deterministic config.
    vocab_size = 50
    emb_dim = 32
    dim_channel = 8
    kernel_wins = (3, 4, 5)
    num_class = 4
    batch = 2
    seq_len = 16

    key = jax.random.PRNGKey(0)
    pkey, xkey = jax.random.split(key)
    params = init_params(pkey, vocab_size, emb_dim, dim_channel, kernel_wins, num_class)
    token_ids = jax.random.randint(xkey, (batch, seq_len), 0, vocab_size, jnp.int32)

    logits = textcnn_forward(params, token_ids)
    jax.block_until_ready(logits)
    assert logits.shape == (batch, num_class)

    ref = textcnn_reference(params, token_ids)
    err = float(jnp.max(jnp.abs(logits - ref)))
    assert err < 5e-2, f"kernel/reference mismatch: max abs err = {err}"

    print("KERNEL_OK")
</pallas_src>

<mosaic_0001>
module attributes {stable_mosaic.version = 11 : i64} {
  func.func @_textcnn_kernel(%arg0: i32, %arg1: memref<8x16x32xbf16, #tpu.memory_space<vmem>>, %arg2: memref<160x128xbf16, #tpu.memory_space<vmem>>, %arg3: memref<16x128xf32, #tpu.memory_space<vmem>>, %arg4: memref<1x128xf32, #tpu.memory_space<vmem>>, %arg5: memref<128x128xbf16, #tpu.memory_space<vmem>>, %arg6: memref<1x128xf32, #tpu.memory_space<vmem>>, %arg7: memref<8x128xf32, #tpu.memory_space<vmem>>) attributes {dimension_semantics = [#tpu.dimension_semantics<parallel>], iteration_bounds = array<i64: 1>, scalar_prefetch = 0 : i64, scratch_operands = 0 : i64, tpu.core_type = #tpu.core_type<tc>, window_params = [{transform_indices = @transform_0, window_bounds = array<i64: 8, 16, 32>}, {pipeline_mode = #tpu.pipeline_mode<synchronous>, transform_indices = @transform_1, window_bounds = array<i64: 160, 128>}, {pipeline_mode = #tpu.pipeline_mode<synchronous>, transform_indices = @transform_2, window_bounds = array<i64: 16, 128>}, {pipeline_mode = #tpu.pipeline_mode<synchronous>, transform_indices = @transform_3, window_bounds = array<i64: 1, 128>}, {pipeline_mode = #tpu.pipeline_mode<synchronous>, transform_indices = @transform_4, window_bounds = array<i64: 128, 128>}, {pipeline_mode = #tpu.pipeline_mode<synchronous>, transform_indices = @transform_5, window_bounds = array<i64: 1, 128>}, {transform_indices = @transform_6, window_bounds = array<i64: 8, 128>}]} {
    %c0 = arith.constant 0 : index
    %c0_0 = arith.constant 0 : index
    %c0_1 = arith.constant 0 : index
    %0 = vector.load %arg1[%c0, %c0_0, %c0_1] : memref<8x16x32xbf16, #tpu.memory_space<vmem>>, vector<8x16x32xbf16>
    %1 = vector.shape_cast %0 : vector<8x16x32xbf16> to vector<128x32xbf16>
    %2 = arith.extf %1 : vector<128x32xbf16> to vector<128x32xf32>
    %c127_i32 = arith.constant 127 : i32
    %3 = tpu.dynamic_rotate %2 by %c127_i32 dim 0 : vector<128x32xf32>, i32 -> vector<128x32xf32>
    %4 = arith.truncf %3 : vector<128x32xf32> to vector<128x32xbf16>
    %c126_i32 = arith.constant 126 : i32
    %5 = tpu.dynamic_rotate %2 by %c126_i32 dim 0 : vector<128x32xf32>, i32 -> vector<128x32xf32>
    %6 = arith.truncf %5 : vector<128x32xf32> to vector<128x32xbf16>
    %c125_i32 = arith.constant 125 : i32
    %7 = tpu.dynamic_rotate %2 by %c125_i32 dim 0 : vector<128x32xf32>, i32 -> vector<128x32xf32>
    %8 = arith.truncf %7 : vector<128x32xf32> to vector<128x32xbf16>
    %c124_i32 = arith.constant 124 : i32
    %9 = tpu.dynamic_rotate %2 by %c124_i32 dim 0 : vector<128x32xf32>, i32 -> vector<128x32xf32>
    %10 = arith.truncf %9 : vector<128x32xf32> to vector<128x32xbf16>
    %11 = tpu.concatenate %1, %4, %6, %8, %10 in 1 : vector<128x32xbf16>, vector<128x32xbf16>, vector<128x32xbf16>, vector<128x32xbf16>, vector<128x32xbf16> -> vector<128x160xbf16>
    %c0_2 = arith.constant 0 : index
    %c0_3 = arith.constant 0 : index
    %12 = vector.load %arg2[%c0_2, %c0_3] : memref<160x128xbf16, #tpu.memory_space<vmem>>, vector<160x128xbf16>
    %cst = arith.constant dense<0.000000e+00> : vector<128x128xf32>
    %13 = tpu.matmul %11, %12, %cst {dimension_numbers = #tpu.dot_dimension_numbers<[1], [0], [0], [1], [0, 0, 1, 1], [], []>} : vector<128x160xbf16>, vector<160x128xbf16>, vector<128x128xf32> -> vector<128x128xf32>
    %14 = vector.shape_cast %13 : vector<128x128xf32> to vector<8x16x128xf32>
    %c0_4 = arith.constant 0 : index
    %c0_5 = arith.constant 0 : index
    %15 = vector.load %arg3[%c0_4, %c0_5] : memref<16x128xf32, #tpu.memory_space<vmem>>, vector<16x128xf32>
    %16 = vector.shape_cast %15 : vector<16x128xf32> to vector<1x16x128xf32>
    %17 = vector.broadcast %16 : vector<1x16x128xf32> to vector<8x16x128xf32>
    %18 = arith.addf %14, %17 : vector<8x16x128xf32>
    %cst_6 = arith.constant dense<0xFF800000> : vector<8x128xf32>
    %19 = vector.multi_reduction <maximumf>, %18, %cst_6 [1] : vector<8x16x128xf32> to vector<8x128xf32>
    %c0_7 = arith.constant 0 : index
    %c0_8 = arith.constant 0 : index
    %20 = vector.load %arg4[%c0_7, %c0_8] : memref<1x128xf32, #tpu.memory_space<vmem>>, vector<1x128xf32>
    %21 = vector.broadcast %20 : vector<1x128xf32> to vector<8x128xf32>
    %22 = arith.addf %19, %21 : vector<8x128xf32>
    %cst_9 = arith.constant 0.000000e+00 : f32
    %23 = vector.broadcast %cst_9 : f32 to vector<8x128xf32>
    %24 = arith.maximumf %22, %23 : vector<8x128xf32>
    %25 = arith.truncf %24 : vector<8x128xf32> to vector<8x128xbf16>
    %c0_10 = arith.constant 0 : index
    %c0_11 = arith.constant 0 : index
    %26 = vector.load %arg5[%c0_10, %c0_11] : memref<128x128xbf16, #tpu.memory_space<vmem>>, vector<128x128xbf16>
    %cst_12 = arith.constant dense<0.000000e+00> : vector<8x128xf32>
    %27 = tpu.matmul %25, %26, %cst_12 {dimension_numbers = #tpu.dot_dimension_numbers<[1], [0], [0], [1], [0, 0, 1, 1], [], []>} : vector<8x128xbf16>, vector<128x128xbf16>, vector<8x128xf32> -> vector<8x128xf32>
    %c0_13 = arith.constant 0 : index
    %c0_14 = arith.constant 0 : index
    %28 = vector.load %arg6[%c0_13, %c0_14] : memref<1x128xf32, #tpu.memory_space<vmem>>, vector<1x128xf32>
    %29 = vector.broadcast %28 : vector<1x128xf32> to vector<8x128xf32>
    %30 = arith.addf %27, %29 : vector<8x128xf32>
    %c0_15 = arith.constant 0 : index
    %c0_16 = arith.constant 0 : index
    %31 = vector.load %arg7[%c0_15, %c0_16] : memref<8x128xf32, #tpu.memory_space<vmem>>, vector<8x128xf32>
    tpu.vector_store %arg7[%c0_15, %c0_16], %30 {strides = array<i32>} : memref<8x128xf32, #tpu.memory_space<vmem>>, vector<8x128xf32>,
    return
  }
  func.func @transform_0(%arg0: i32) -> (i32, i32, i32) {
    %c0_i32 = arith.constant 0 : i32
    %c0_i32_0 = arith.constant 0 : i32
    %c0_i32_1 = arith.constant 0 : i32
    return %arg0, %c0_i32, %c0_i32_0 : i32, i32, i32
  }
  func.func @transform_1(%arg0: i32) -> (i32, i32) {
    %c0_i32 = arith.constant 0 : i32
    %c0_i32_0 = arith.constant 0 : i32
    %c0_i32_1 = arith.constant 0 : i32
    return %c0_i32, %c0_i32_0 : i32, i32
  }
  func.func @transform_2(%arg0: i32) -> (i32, i32) {
    %c0_i32 = arith.constant 0 : i32
    %c0_i32_0 = arith.constant 0 : i32
    %c0_i32_1 = arith.constant 0 : i32
    return %c0_i32, %c0_i32_0 : i32, i32
  }
  func.func @transform_3(%arg0: i32) -> (i32, i32) {
    %c0_i32 = arith.constant 0 : i32
    %c0_i32_0 = arith.constant 0 : i32
    %c0_i32_1 = arith.constant 0 : i32
    return %c0_i32, %c0_i32_0 : i32, i32
  }
  func.func @transform_4(%arg0: i32) -> (i32, i32) {
    %c0_i32 = arith.constant 0 : i32
    %c0_i32_0 = arith.constant 0 : i32
    %c0_i32_1 = arith.constant 0 : i32
    return %c0_i32, %c0_i32_0 : i32, i32
  }
  func.func @transform_5(%arg0: i32) -> (i32, i32) {
    %c0_i32 = arith.constant 0 : i32
    %c0_i32_0 = arith.constant 0 : i32
    %c0_i32_1 = arith.constant 0 : i32
    return %c0_i32, %c0_i32_0 : i32, i32
  }
  func.func @transform_6(%arg0: i32) -> (i32, i32) {
    %c0_i32 = arith.constant 0 : i32
    %c0_i32_0 = arith.constant 0 : i32
    return %arg0, %c0_i32 : i32, i32
  }
}

</mosaic_0001>

<llo_original>
// kernel: tpu_custom_call.1
$region0: #{tpu_custom_call.1}
  #allocation0 [shape = 'u32[]', space=smem, size = 0x4, offset = 0x4, fixed_abs, tag = 'smem constant byte address 0x4 - core index']
  #allocation1 [shape = 'u32[144,128]{1,0:T(1,128)}', space=vmem, size = 0x12000, scoped, tag = 'internal scratch']
  %s0 = inlined_call_operand.hbm [shape: bf16[8,16,32], index: 0, kind: input, shape index: {}]
  %s1 = inlined_call_operand.hbm [shape: bf16[160,128], index: 1, kind: input, shape index: {}]
  %s2 = inlined_call_operand.hbm [shape: f32[16,128], index: 2, kind: input, shape index: {}]
  %s3 = inlined_call_operand.vmem [shape: f32[1,128], index: 3, kind: input, shape index: {}]
  %s4 = inlined_call_operand.hbm [shape: bf16[128,128], index: 4, kind: input, shape index: {}]
  %s5 = inlined_call_operand.vmem [shape: f32[1,128], index: 5, kind: input, shape index: {}]
  %s6 = inlined_call_operand.hbm [shape: f32[8,128], index: 6, kind: output, shape index: {}]
  %s7 = sld [smem:[#allocation0]]
  $region50: #{tpu_custom_call.1} parent=0
    _
  %s9 = ssub.s32 1, %s7
  %s10 = scalar_select 0, %s9, %s7
  $region1: #{tpu_custom_call.1} parent=0
    #allocation2 [shape = 'u8[32768]{0}', space=vmem, size = 0x8000, scoped, tag = 'input window, operand 0, single buffered']
    #allocation3 [shape = 's32[1]{0}', space=sflag, size = 0x4, scoped, tag = 'scoped memory for tpu_custom_call.1']
    #allocation4 [shape = 's32[1]{0}', space=sflag, size = 0x4, scoped, tag = 'scoped memory for tpu_custom_call.1']
    #allocation5 [shape = 'u8[40960]{0}', space=vmem, size = 0xa000, scoped, tag = 'input window, operand 1, single buffered']
    #allocation6 [shape = 's32[1]{0}', space=sflag, size = 0x4, scoped, tag = 'scoped memory for tpu_custom_call.1']
    #allocation7 [shape = 'u8[8192]{0}', space=vmem, size = 0x2000, scoped, tag = 'input window, operand 2, single buffered']
    #allocation8 [shape = 'u8[32768]{0}', space=vmem, size = 0x8000, scoped, tag = 'input window, operand 4, single buffered']
    #allocation9 [shape = 's32[1]{0}', space=sflag, size = 0x4, scoped, tag = 'scoped memory for tpu_custom_call.1']
    #allocation10 [shape = 'u8[4096]{0}', space=vmem, size = 0x1000, scoped, tag = 'output window, operand 0, single buffered']
    %11 = vsyncpa [#allocation3], 0
    %12 = vsyncpa [#allocation6], 0
    %13 = vsyncpa [#allocation9], 0
    %14 = vsyncpa [#allocation4], 0
    // Predicated region
    $region2: #{tpu_custom_call.1} parent=1 // pred_check
      _
    $region3: #{tpu_custom_call.1} parent=1 // pred_check_branch
      %16 = sbr.rel (0) target = $region5
    $region4: #{tpu_custom_call.1} parent=1 // pred_region
      %s18 = ssub.s32 1024, 1024
      %19 = vsyncadd [#allocation3], %s18
      %s20 = sshll.u32 [#allocation2], 4
      %s21 = int_to_ptr.vmem [resolvable:$true] %s20
      %26 = dma.hbm_to_vmem [thread:$0]  %s0, 1024, %s21, [#allocation3], 64, 64, 4
    $region5: #{tpu_custom_call.1} parent=1 // pred_fallthru
      _
    // Predicated region
    $region6: #{tpu_custom_call.1} parent=1 // pred_check
      _
    $region7: #{tpu_custom_call.1} parent=1 // pred_check_branch
      %28 = sbr.rel (0) target = $region9
    $region8: #{tpu_custom_call.1} parent=1 // pred_region
      %s30 = ssub.s32 1280, 1280
      %31 = vsyncadd [#allocation6], %s30
      %s32 = sshll.u32 [#allocation5], 4
      %s33 = int_to_ptr.vmem [resolvable:$true] %s32
      %38 = dma.hbm_to_vmem [thread:$0]  %s1, 1280, %s33, [#allocation6], 64, 64, 4
    $region9: #{tpu_custom_call.1} parent=1 // pred_fallthru
      _
    // Predicated region
    $region10: #{tpu_custom_call.1} parent=1 // pred_check
      _
    $region11: #{tpu_custom_call.1} parent=1 // pred_check_branch
      %40 = sbr.rel (0) target = $region13
    $region12: #{tpu_custom_call.1} parent=1 // pred_region
      %s42 = ssub.s32 256, 256
      %43 = vsyncadd [#allocation6], %s42
      %s44 = sshll.u32 [#allocation7], 4
      %s45 = int_to_ptr.vmem [resolvable:$true] %s44
      %50 = dma.hbm_to_vmem [thread:$0]  %s2, 256, %s45, [#allocation6], 128, 128, 8
    $region13: #{tpu_custom_call.1} parent=1 // pred_fallthru
      _
    // Predicated region
    $region14: #{tpu_custom_call.1} parent=1 // pred_check
      _
    $region15: #{tpu_custom_call.1} parent=1 // pred_check_branch
      %52 = sbr.rel (0) target = $region17
    $region16: #{tpu_custom_call.1} parent=1 // pred_region
      _
    $region17: #{tpu_custom_call.1} parent=1 // pred_fallthru
      _
    // Predicated region
    $region18: #{tpu_custom_call.1} parent=1 // pred_check
      _
    $region19: #{tpu_custom_call.1} parent=1 // pred_check_branch
      %54 = sbr.rel (0) target = $region21
    $region20: #{tpu_custom_call.1} parent=1 // pred_region
      %s56 = ssub.s32 1024, 1024
      %57 = vsyncadd [#allocation9], %s56
      %s58 = sshll.u32 [#allocation8], 4
      %s59 = int_to_ptr.vmem [resolvable:$true] %s58
      %64 = dma.hbm_to_vmem [thread:$0]  %s4, 1024, %s59, [#allocation9], 64, 64, 4
    $region21: #{tpu_custom_call.1} parent=1 // pred_fallthru
      _
    // Predicated region
    $region22: #{tpu_custom_call.1} parent=1 // pred_check
      _
    $region23: #{tpu_custom_call.1} parent=1 // pred_check_branch
      %66 = sbr.rel (0) target = $region25
    $region24: #{tpu_custom_call.1} parent=1 // pred_region
      _
    $region25: #{tpu_custom_call.1} parent=1 // pred_fallthru
      _
    // Predicated region
    $region26: #{tpu_custom_call.1} parent=1 // pred_check
      _
    $region27: #{tpu_custom_call.1} parent=1 // pred_check_branch
      %68 = sbr.rel (0) target = $region29
    $region28: #{tpu_custom_call.1} parent=1 // pred_region
      %69 = dma.done [#allocation3], 1024
    $region29: #{tpu_custom_call.1} parent=1 // pred_fallthru
      _
    // Predicated region
    $region30: #{tpu_custom_call.1} parent=1 // pred_check
      _
    $region31: #{tpu_custom_call.1} parent=1 // pred_check_branch
      %71 = sbr.rel (0) target = $region33
    $region32: #{tpu_custom_call.1} parent=1 // pred_region
      %72 = dma.done [#allocation6], 1280
    $region33: #{tpu_custom_call.1} parent=1 // pred_fallthru
      _
    // Predicated region
    $region34: #{tpu_custom_call.1} parent=1 // pred_check
      _
    $region35: #{tpu_custom_call.1} parent=1 // pred_check_branch
      %74 = sbr.rel (0) target = $region37
    $region36: #{tpu_custom_call.1} parent=1 // pred_region
      %75 = dma.done [#allocation6], 256
    $region37: #{tpu_custom_call.1} parent=1 // pred_fallthru
      _
    // Predicated region
    $region38: #{tpu_custom_call.1} parent=1 // pred_check
      _
    $region39: #{tpu_custom_call.1} parent=1 // pred_check_branch
      %77 = sbr.rel (0) target = $region41
    $region40: #{tpu_custom_call.1} parent=1 // pred_region
      %78 = dma.done [#allocation9], 1024
    $region41: #{tpu_custom_call.1} parent=1 // pred_fallthru
      _
    %v80 = vld [vmem:[#allocation2] sm:$0xf]
    %v81 = vld [vmem:[#allocation2 + $0x4] sm:$0xf]
    %v82 = vld [vmem:[#allocation2 + $0x8] sm:$0xf]
    %v83 = vld [vmem:[#allocation2 + $0xc] sm:$0xf]
    %v84 = vld [vmem:[#allocation2 + $0x10] sm:$0xf]
    %v85 = vld [vmem:[#allocation2 + $0x14] sm:$0xf]
    %v86 = vld [vmem:[#allocation2 + $0x18] sm:$0xf]
    %v87 = vld [vmem:[#allocation2 + $0x1c] sm:$0xf]
    %v88 = vld [vmem:[#allocation2 + $0x20] sm:$0xf]
    %v89 = vld [vmem:[#allocation2 + $0x24] sm:$0xf]
    %v90 = vld [vmem:[#allocation2 + $0x28] sm:$0xf]
    %v91 = vld [vmem:[#allocation2 + $0x2c] sm:$0xf]
    %v92 = vld [vmem:[#allocation2 + $0x30] sm:$0xf]
    %v93 = vld [vmem:[#allocation2 + $0x34] sm:$0xf]
    %v94 = vld [vmem:[#allocation2 + $0x38] sm:$0xf]
    %v95 = vld [vmem:[#allocation2 + $0x3c] sm:$0xf]
    %v96 = vunpack.c.l.bf16 %v80
    %v97 = vunpack.c.l.bf16 %v81
    %v98 = vunpack.c.l.bf16 %v82
    %v99 = vunpack.c.l.bf16 %v83
    %v100 = vunpack.c.l.bf16 %v84
    %v101 = vunpack.c.l.bf16 %v85
    %v102 = vunpack.c.l.bf16 %v86
    %v103 = vunpack.c.l.bf16 %v87
    %v104 = vunpack.c.l.bf16 %v88
    %v105 = vunpack.c.l.bf16 %v89
    %v106 = vunpack.c.l.bf16 %v90
    %v107 = vunpack.c.l.bf16 %v91
    %v108 = vunpack.c.l.bf16 %v92
    %v109 = vunpack.c.l.bf16 %v93
    %v110 = vunpack.c.l.bf16 %v94
    %v111 = vunpack.c.l.bf16 %v95
    %v112 = vrot.slane %v96, 1
    %v113 = vrot.slane %v97, 1
    %v114 = vrot.slane %v98, 1
    %v115 = vrot.slane %v99, 1
    %v116 = vrot.slane %v100, 1
    %v117 = vrot.slane %v101, 1
    %v118 = vrot.slane %v102, 1
    %v119 = vrot.slane %v103, 1
    %v120 = vrot.slane %v104, 1
    %v121 = vrot.slane %v105, 1
    %v122 = vrot.slane %v106, 1
    %v123 = vrot.slane %v107, 1
    %v124 = vrot.slane %v108, 1
    %v125 = vrot.slane %v109, 1
    %v126 = vrot.slane %v110, 1
    %v127 = vrot.slane %v111, 1
    %v128 = vlaneseq
    %v129 = vshrl.u32 %v128, 7
    %vm130 = vcmp.lt.s32.totalorder %v129, 7
    %v131 = vsel %vm130, %v126, %v127
    %v132 = vsel %vm130, %v125, %v126
    %v133 = vsel %vm130, %v124, %v125
    %v134 = vsel %vm130, %v123, %v124
    %v135 = vsel %vm130, %v122, %v123
    %v136 = vsel %vm130, %v121, %v122
    %v137 = vsel %vm130, %v120, %v121
    %v138 = vsel %vm130, %v119, %v120
    %v139 = vsel %vm130, %v118, %v119
    %v140 = vsel %vm130, %v117, %v118
    %v141 = vsel %vm130, %v116, %v117
    %v142 = vsel %vm130, %v115, %v116
    %v143 = vsel %vm130, %v114, %v115
    %v144 = vsel %vm130, %v113, %v114
    %v145 = vsel %vm130, %v112, %v113
    %v146 = vsel %vm130, %v127, %v112
    %v147 = vpack.c.bf16 %v144, %v145
    %v148 = vpack.c.bf16 %v142, %v143
    %v149 = vpack.c.bf16 %v140, %v141
    %v150 = vpack.c.bf16 %v138, %v139
    %v151 = vpack.c.bf16 %v136, %v137
    %v152 = vpack.c.bf16 %v134, %v135
    %v153 = vpack.c.bf16 %v132, %v133
    %v154 = vpack.c.bf16 %v146, %v131
    %v155 = vrot.slane %v96, 2
    %v156 = vrot.slane %v97, 2
    %v157 = vrot.slane %v98, 2
    %v158 = vrot.slane %v99, 2
    %v159 = vrot.slane %v100, 2
    %v160 = vrot.slane %v101, 2
    %v161 = vrot.slane %v102, 2
    %v162 = vrot.slane %v103, 2
    %v163 = vrot.slane %v104, 2
    %v164 = vrot.slane %v105, 2
    %v165 = vrot.slane %v106, 2
    %v166 = vrot.slane %v107, 2
    %v167 = vrot.slane %v108, 2
    %v168 = vrot.slane %v109, 2
    %v169 = vrot.slane %v110, 2
    %v170 = vrot.slane %v111, 2
    %vm171 = vcmp.lt.s32.totalorder %v129, 6
    %v172 = vsel %vm171, %v169, %v170
    %v173 = vsel %vm171, %v168, %v169
    %v174 = vsel %vm171, %v167, %v168
    %v175 = vsel %vm171, %v166, %v167
    %v176 = vsel %vm171, %v165, %v166
    %v177 = vsel %vm171, %v164, %v165
    %v178 = vsel %vm171, %v163, %v164
    %v179 = vsel %vm171, %v162, %v163
    %v180 = vsel %vm171, %v161, %v162
    %v181 = vsel %vm171, %v160, %v161
    %v182 = vsel %vm171, %v159, %v160
    %v183 = vsel %vm171, %v158, %v159
    %v184 = vsel %vm171, %v157, %v158
    %v185 = vsel %vm171, %v156, %v157
    %v186 = vsel %vm171, %v155, %v156
    %v187 = vsel %vm171, %v170, %v155
    %v188 = vpack.c.bf16 %v185, %v186
    %v189 = vpack.c.bf16 %v183, %v184
    %v190 = vpack.c.bf16 %v181, %v182
    %v191 = vpack.c.bf16 %v179, %v180
    %v192 = vpack.c.bf16 %v177, %v178
    %v193 = vpack.c.bf16 %v175, %v176
    %v194 = vpack.c.bf16 %v173, %v174
    %v195 = vpack.c.bf16 %v187, %v172
    %v196 = vrot.slane %v96, 3
    %v197 = vrot.slane %v97, 3
    %v198 = vrot.slane %v98, 3
    %v199 = vrot.slane %v99, 3
    %v200 = vrot.slane %v100, 3
    %v201 = vrot.slane %v101, 3
    %v202 = vrot.slane %v102, 3
    %v203 = vrot.slane %v103, 3
    %v204 = vrot.slane %v104, 3
    %v205 = vrot.slane %v105, 3
    %v206 = vrot.slane %v106, 3
    %v207 = vrot.slane %v107, 3
    %v208 = vrot.slane %v108, 3
    %v209 = vrot.slane %v109, 3
    %v210 = vrot.slane %v110, 3
    %v211 = vrot.slane %v111, 3
    %vm212 = vcmp.lt.s32.totalorder %v129, 5
    %v213 = vsel %vm212, %v210, %v211
    %v214 = vsel %vm212, %v209, %v210
    %v215 = vsel %vm212, %v208, %v209
    %v216 = vsel %vm212, %v207, %v208
    %v217 = vsel %vm212, %v206, %v207
    %v218 = vsel %vm212, %v205, %v206
    %v219 = vsel %vm212, %v204, %v205
    %v220 = vsel %vm212, %v203, %v204
    %v221 = vsel %vm212, %v202, %v203
    %v222 = vsel %vm212, %v201, %v202
    %v223 = vsel %vm212, %v200, %v201
    %v224 = vsel %vm212, %v199, %v200
    %v225 = vsel %vm212, %v198, %v199
    %v226 = vsel %vm212, %v197, %v198
    %v227 = vsel %vm212, %v196, %v197
    %v228 = vsel %vm212, %v211, %v196
    %v229 = vpack.c.bf16 %v226, %v227
    %v230 = vpack.c.bf16 %v224, %v225
    %v231 = vpack.c.bf16 %v222, %v223
    %v232 = vpack.c.bf16 %v220, %v221
    %v233 = vpack.c.bf16 %v218, %v219
    %v234 = vpack.c.bf16 %v216, %v217
    %v235 = vpack.c.bf16 %v214, %v215
    %v236 = vpack.c.bf16 %v228, %v213
    %v237 = vrot.slane %v96, 4
    %v238 = vrot.slane %v97, 4
    %v239 = vrot.slane %v98, 4
    %v240 = vrot.slane %v99, 4
    %v241 = vrot.slane %v100, 4
    %v242 = vrot.slane %v101, 4
    %v243 = vrot.slane %v102, 4
    %v244 = vrot.slane %v103, 4
    %v245 = vrot.slane %v104, 4
    %v246 = vrot.slane %v105, 4
    %v247 = vrot.slane %v106, 4
    %v248 = vrot.slane %v107, 4
    %v249 = vrot.slane %v108, 4
    %v250 = vrot.slane %v109, 4
    %v251 = vrot.slane %v110, 4
    %v252 = vrot.slane %v111, 4
    %vm253 = vcmp.lt.s32.totalorder %v129, 4
    %v254 = vsel %vm253, %v251, %v252
    %v255 = vsel %vm253, %v250, %v251
    %v256 = vsel %vm253, %v249, %v250
    %v257 = vsel %vm253, %v248, %v249
    %v258 = vsel %vm253, %v247, %v248
    %v259 = vsel %vm253, %v246, %v247
    %v260 = vsel %vm253, %v245, %v246
    %v261 = vsel %vm253, %v244, %v245
    %v262 = vsel %vm253, %v243, %v244
    %v263 = vsel %vm253, %v242, %v243
    %v264 = vsel %vm253, %v241, %v242
    %v265 = vsel %vm253, %v240, %v241
    %v266 = vsel %vm253, %v239, %v240
    %v267 = vsel %vm253, %v238, %v239
    %v268 = vsel %vm253, %v237, %v238
    %v269 = vsel %vm253, %v252, %v237
    %v270 = vpack.c.bf16 %v267, %v268
    %v271 = vpack.c.bf16 %v265, %v266
    %v272 = vpack.c.bf16 %v263, %v264
    %v273 = vpack.c.bf16 %v261, %v262
    %v274 = vpack.c.bf16 %v259, %v260
    %v275 = vpack.c.bf16 %v257, %v258
    %v276 = vpack.c.bf16 %v255, %v256
    %v277 = vpack.c.bf16 %v269, %v254
    %v294 = vunpack.c.l.b16 %v80
    %v295 = vunpack.c.l.b16 %v81
    %v296 = vunpack.c.l.b16 %v82
    %v297 = vunpack.c.l.b16 %v83
    %v298 = vunpack.c.l.b16 %v84
    %v299 = vunpack.c.l.b16 %v85
    %v300 = vunpack.c.l.b16 %v86
    %v301 = vunpack.c.l.b16 %v87
    %v302 = vunpack.c.l.b16 %v88
    %v303 = vunpack.c.l.b16 %v89
    %v304 = vunpack.c.l.b16 %v90
    %v305 = vunpack.c.l.b16 %v91
    %v306 = vunpack.c.l.b16 %v92
    %v307 = vunpack.c.l.b16 %v93
    %v308 = vunpack.c.l.b16 %v94
    %v309 = vunpack.c.l.b16 %v95
    %v310 = vpack.c.b16 %v295, %v294
    %v311 = vpack.c.b16 %v297, %v296
    %v312 = vpack.c.b16 %v299, %v298
    %v313 = vpack.c.b16 %v301, %v300
    %v314 = vpack.c.b16 %v303, %v302
    %v315 = vpack.c.b16 %v305, %v304
    %v316 = vpack.c.b16 %v307, %v306
    %v317 = vpack.c.b16 %v309, %v308
    %326 = vrot.lane.b32.xlu0 %v147, 32
    %v327 = vpop.permute.xlu0 %326
    %328 = vrot.lane.b32.xlu0 %v148, 32
    %v329 = vpop.permute.xlu0 %328
    %330 = vrot.lane.b32.xlu0 %v149, 32
    %v331 = vpop.permute.xlu0 %330
    %332 = vrot.lane.b32.xlu0 %v150, 32
    %v333 = vpop.permute.xlu0 %332
    %334 = vrot.lane.b32.xlu0 %v151, 32
    %v335 = vpop.permute.xlu0 %334
    %336 = vrot.lane.b32.xlu0 %v152, 32
    %v337 = vpop.permute.xlu0 %336
    %338 = vrot.lane.b32.xlu0 %v153, 32
    %v339 = vpop.permute.xlu0 %338
    %340 = vrot.lane.b32.xlu0 %v154, 32
    %v341 = vpop.permute.xlu0 %340
    %350 = vrot.lane.b32.xlu0 %v188, 64
    %v351 = vpop.permute.xlu0 %350
    %352 = vrot.lane.b32.xlu0 %v189, 64
    %v353 = vpop.permute.xlu0 %352
    %354 = vrot.lane.b32.xlu0 %v190, 64
    %v355 = vpop.permute.xlu0 %354
    %356 = vrot.lane.b32.xlu0 %v191, 64
    %v357 = vpop.permute.xlu0 %356
    %358 = vrot.lane.b32.xlu0 %v192, 64
    %v359 = vpop.permute.xlu0 %358
    %360 = vrot.lane.b32.xlu0 %v193, 64
    %v361 = vpop.permute.xlu0 %360
    %362 = vrot.lane.b32.xlu0 %v194, 64
    %v363 = vpop.permute.xlu0 %362
    %364 = vrot.lane.b32.xlu0 %v195, 64
    %v365 = vpop.permute.xlu0 %364
    %374 = vrot.lane.b32.xlu0 %v229, 96
    %v375 = vpop.permute.xlu0 %374
    %376 = vrot.lane.b32.xlu0 %v230, 96
    %v377 = vpop.permute.xlu0 %376
    %378 = vrot.lane.b32.xlu0 %v231, 96
    %v379 = vpop.permute.xlu0 %378
    %380 = vrot.lane.b32.xlu0 %v232, 96
    %v381 = vpop.permute.xlu0 %380
    %382 = vrot.lane.b32.xlu0 %v233, 96
    %v383 = vpop.permute.xlu0 %382
    %384 = vrot.lane.b32.xlu0 %v234, 96
    %v385 = vpop.permute.xlu0 %384
    %386 = vrot.lane.b32.xlu0 %v235, 96
    %v387 = vpop.permute.xlu0 %386
    %388 = vrot.lane.b32.xlu0 %v236, 96
    %v389 = vpop.permute.xlu0 %388
    %vm390 = vcmask 261120
    %v393 = vsel %vm390, %v310, %v327
    %v396 = vsel %vm390, %v311, %v329
    %v399 = vsel %vm390, %v312, %v331
    %v402 = vsel %vm390, %v313, %v333
    %v405 = vsel %vm390, %v314, %v335
    %v408 = vsel %vm390, %v315, %v337
    %v411 = vsel %vm390, %v316, %v339
    %v414 = vsel %vm390, %v317, %v341
    %vm415 = vcmask 523264
    %v417 = vsel %vm415, %v393, %v351
    %v419 = vsel %vm415, %v396, %v353
    %v421 = vsel %vm415, %v399, %v355
    %v423 = vsel %vm415, %v402, %v357
    %v425 = vsel %vm415, %v405, %v359
    %v427 = vsel %vm415, %v408, %v361
    %v429 = vsel %vm415, %v411, %v363
    %v431 = vsel %vm415, %v414, %v365
    %vm432 = vcmask 785408
    %v434 = vsel %vm432, %v417, %v375
    %v437 = vsel %vm432, %v419, %v377
    %v440 = vsel %vm432, %v421, %v379
    %v443 = vsel %vm432, %v423, %v381
    %v446 = vsel %vm432, %v425, %v383
    %v449 = vsel %vm432, %v427, %v385
    %v452 = vsel %vm432, %v429, %v387
    %v455 = vsel %vm432, %v431, %v389
    %v457 = vld [vmem:[#allocation5] sm:$0xf]
    %v458 = vld [vmem:[#allocation5 + $0x4] sm:$0xf]
    %v459 = vld [vmem:[#allocation5 + $0x8] sm:$0xf]
    %v460 = vld [vmem:[#allocation5 + $0xc] sm:$0xf]
    %v461 = vld [vmem:[#allocation5 + $0x10] sm:$0xf]
    %v462 = vld [vmem:[#allocation5 + $0x14] sm:$0xf]
    %v463 = vld [vmem:[#allocation5 + $0x18] sm:$0xf]
    %v464 = vld [vmem:[#allocation5 + $0x1c] sm:$0xf]
    %v465 = vld [vmem:[#allocation5 + $0x20] sm:$0xf]
    %v466 = vld [vmem:[#allocation5 + $0x24] sm:$0xf]
    %v467 = vld [vmem:[#allocation5 + $0x28] sm:$0xf]
    %v468 = vld [vmem:[#allocation5 + $0x2c] sm:$0xf]
    %v469 = vld [vmem:[#allocation5 + $0x30] sm:$0xf]
    %v470 = vld [vmem:[#allocation5 + $0x34] sm:$0xf]
    %v471 = vld [vmem:[#allocation5 + $0x38] sm:$0xf]
    %v472 = vld [vmem:[#allocation5 + $0x3c] sm:$0xf]
    %v473 = vld [vmem:[#allocation5 + $0x40] sm:$0xf]
    %v474 = vld [vmem:[#allocation5 + $0x44] sm:$0xf]
    %v475 = vld [vmem:[#allocation5 + $0x48] sm:$0xf]
    %v476 = vld [vmem:[#allocation5 + $0x4c] sm:$0xf]
    %v497 = vunpack.c.l.b16 %v457
    %v498 = vunpack.c.l.b16 %v458
    %v499 = vunpack.c.l.b16 %v459
    %v500 = vunpack.c.l.b16 %v460
    %v501 = vunpack.c.l.b16 %v461
    %v502 = vunpack.c.l.b16 %v462
    %v503 = vunpack.c.l.b16 %v463
    %v504 = vunpack.c.l.b16 %v464
    %v505 = vunpack.c.l.b16 %v465
    %v506 = vunpack.c.l.b16 %v466
    %v507 = vunpack.c.l.b16 %v467
    %v508 = vunpack.c.l.b16 %v468
    %v509 = vunpack.c.l.b16 %v469
    %v510 = vunpack.c.l.b16 %v470
    %v511 = vunpack.c.l.b16 %v471
    %v512 = vunpack.c.l.b16 %v472
    %v513 = vunpack.c.l.b16 %v473
    %v514 = vunpack.c.l.b16 %v474
    %v515 = vunpack.c.l.b16 %v475
    %v516 = vunpack.c.l.b16 %v476
    %v517 = vpack.c.b16 %v498, %v497
    %v518 = vpack.c.b16 %v500, %v499
    %v519 = vpack.c.b16 %v502, %v501
    %v520 = vpack.c.b16 %v504, %v503
    %v521 = vpack.c.b16 %v506, %v505
    %v522 = vpack.c.b16 %v508, %v507
    %v523 = vpack.c.b16 %v510, %v509
    %v524 = vpack.c.b16 %v512, %v511
    %v525 = vpack.c.b16 %v514, %v513
    %v526 = vpack.c.b16 %v516, %v515
    %v538 = vsel %vm390, %v270, 0
    %v541 = vsel %vm390, %v271, 0
    %v544 = vsel %vm390, %v272, 0
    %v547 = vsel %vm390, %v273, 0
    %v550 = vsel %vm390, %v274, 0
    %v553 = vsel %vm390, %v275, 0
    %v556 = vsel %vm390, %v276, 0
    %v559 = vsel %vm390, %v277, 0
    %561 = vmatprep.subr.bf16.mxu0 0
    %562 = vmatpush1.bf16.msra.mxu0 %v524
    %563 = vmatprep.subr.bf16.mxu0 0
    %564 = vmatpush1.bf16.msra.mxu0 %v523
    %565 = vmatprep.subr.bf16.mxu0 0
    %566 = vmatpush1.bf16.msra.mxu0 %v522
    %567 = vmatprep.subr.bf16.mxu0 0
    %568 = vmatpush1.bf16.msra.mxu0 %v521
    %569 = vmatprep.subr.bf16.mxu0 0
    %570 = vmatpush1.bf16.msra.mxu0 %v520
    %571 = vmatprep.subr.bf16.mxu0 0
    %572 = vmatpush1.bf16.msra.mxu0 %v519
    %573 = vmatprep.subr.bf16.mxu0 0
    %574 = vmatpush1.bf16.msra.mxu0 %v518
    %575 = vmatprep.subr.bf16.mxu0 0
    %576 = vmatpush1.bf16.msra.mxu0 %v517
    %577 = vmatprep.subr.bf16.mxu0 0
    %578 = vmatpush2.bf16.msra.mxu0 0
    %579 = vmatprep.subr.bf16.mxu0 0
    %580 = vmatpush2.bf16.msra.mxu0 0
    %581 = vmatprep.subr.bf16.mxu0 0
    %582 = vmatpush2.bf16.msra.mxu0 0
    %583 = vmatprep.subr.bf16.mxu0 0
    %584 = vmatpush2.bf16.msra.mxu0 0
    %585 = vmatprep.subr.bf16.mxu0 0
    %586 = vmatpush2.bf16.msra.mxu0 0
    %587 = vmatprep.subr.bf16.mxu0 0
    %588 = vmatpush2.bf16.msra.mxu0 0
    %589 = vmatprep.subr.bf16.mxu0 0
    %590 = vmatpush2.bf16.msra.mxu0 %v526
    %591 = vmatprep.subr.bf16.mxu0 0
    %592 = vmatpush2.bf16.msra.mxu0 %v525
    %593 = vmatprep.mubr.bf16.mxu0 %v538
    %594 = vmatmul.mubr.bf16.gmra.mxu0 %v434
    %v595 = vpop.f32.mrf.mxu0
    %v596 = vadd.f32 0.0, %v595
    %v597 = vpop.f32.mrf.mxu0
    %v598 = vpop.f32.mrf.mxu0
    %v599 = vadd.f32 0.0, %v598
    %v600 = vpop.f32.mrf.mxu0
    %601 = vmatprep.mubr.bf16.mxu0 %v541
    %602 = vmatmul.mubr.bf16.gmra.mxu0 %v437
    %v603 = vpop.f32.mrf.mxu0
    %v604 = vadd.f32 0.0, %v603
    %v605 = vpop.f32.mrf.mxu0
    %v606 = vpop.f32.mrf.mxu0
    %v607 = vadd.f32 0.0, %v606
    %v608 = vpop.f32.mrf.mxu0
    %609 = vmatprep.mubr.bf16.mxu0 %v544
    %610 = vmatmul.mubr.bf16.gmra.mxu0 %v440
    %v611 = vpop.f32.mrf.mxu0
    %v612 = vadd.f32 0.0, %v611
    %v613 = vpop.f32.mrf.mxu0
    %v614 = vpop.f32.mrf.mxu0
    %v615 = vadd.f32 0.0, %v614
    %v616 = vpop.f32.mrf.mxu0
    %617 = vmatprep.mubr.bf16.mxu0 %v547
    %618 = vmatmul.mubr.bf16.gmra.mxu0 %v443
    %v619 = vpop.f32.mrf.mxu0
    %v620 = vadd.f32 0.0, %v619
    %v621 = vpop.f32.mrf.mxu0
    %v622 = vpop.f32.mrf.mxu0
    %v623 = vadd.f32 0.0, %v622
    %v624 = vpop.f32.mrf.mxu0
    %625 = vmatprep.mubr.bf16.mxu0 %v550
    %626 = vmatmul.mubr.bf16.gmra.mxu0 %v446
    %v627 = vpop.f32.mrf.mxu0
    %v628 = vadd.f32 0.0, %v627
    %v629 = vpop.f32.mrf.mxu0
    %v630 = vpop.f32.mrf.mxu0
    %v631 = vadd.f32 0.0, %v630
    %v632 = vpop.f32.mrf.mxu0
    %633 = vmatprep.mubr.bf16.mxu0 %v553
    %634 = vmatmul.mubr.bf16.gmra.mxu0 %v449
    %v635 = vpop.f32.mrf.mxu0
    %v636 = vadd.f32 0.0, %v635
    %v637 = vpop.f32.mrf.mxu0
    %v638 = vpop.f32.mrf.mxu0
    %v639 = vadd.f32 0.0, %v638
    %v640 = vpop.f32.mrf.mxu0
    %641 = vmatprep.mubr.bf16.mxu0 %v556
    %642 = vmatmul.mubr.bf16.gmra.mxu0 %v452
    %v643 = vpop.f32.mrf.mxu0
    %v644 = vadd.f32 0.0, %v643
    %v645 = vpop.f32.mrf.mxu0
    %v646 = vpop.f32.mrf.mxu0
    %v647 = vadd.f32 0.0, %v646
    %v648 = vpop.f32.mrf.mxu0
    %649 = vmatprep.mubr.bf16.mxu0 %v559
    %650 = vmatmul.mubr.bf16.gmra.mxu0 %v455
    %v651 = vpop.f32.mrf.mxu0
    %v652 = vadd.f32 0.0, %v651
    %v653 = vpop.f32.mrf.mxu0
    %v654 = vpop.f32.mrf.mxu0
    %v655 = vadd.f32 0.0, %v654
    %v656 = vpop.f32.mrf.mxu0
    %657 = vdwg.mxu0
    %v658 = vld [vmem:[#allocation7] sm:$0xff]
    %v659 = vld [vmem:[#allocation7 + $0x8] sm:$0xff]
    %v660 = vadd.f32 %v596, %v658
    %v661 = vadd.f32 %v599, %v659
    %v662 = vadd.f32 %v604, %v658
    %v663 = vadd.f32 %v607, %v659
    %v664 = vadd.f32 %v612, %v658
    %v665 = vadd.f32 %v615, %v659
    %v666 = vadd.f32 %v620, %v658
    %v667 = vadd.f32 %v623, %v659
    %v668 = vadd.f32 %v628, %v658
    %v669 = vadd.f32 %v631, %v659
    %v670 = vadd.f32 %v636, %v658
    %v671 = vadd.f32 %v639, %v659
    %v672 = vadd.f32 %v644, %v658
    %v673 = vadd.f32 %v647, %v659
    %v674 = vadd.f32 %v652, %v658
    %v675 = vadd.f32 %v655, %v659
    %v676 = vmax.f32 %v660, %v661
    %v677 = vrot.slane %v676, 4
    %v678 = vmax.f32 %v676, %v677
    %v679 = vrot.slane %v678, 2
    %v680 = vmax.f32 %v678, %v679
    %v681 = vrot.slane %v680, 1
    %v682 = vmax.f32 %v680, %v681
    %v683 = vmax.f32 %v662, %v663
    %v684 = vrot.slane %v683, 4
    %v685 = vmax.f32 %v683, %v684
    %v686 = vrot.slane %v685, 2
    %v687 = vmax.f32 %v685, %v686
    %v688 = vrot.slane %v687, 1
    %v689 = vmax.f32 %v687, %v688
    %v690 = vmax.f32 %v664, %v665
    %v691 = vrot.slane %v690, 4
    %v692 = vmax.f32 %v690, %v691
    %v693 = vrot.slane %v692, 2
    %v694 = vmax.f32 %v692, %v693
    %v695 = vrot.slane %v694, 1
    %v696 = vmax.f32 %v694, %v695
    %v697 = vmax.f32 %v666, %v667
    %v698 = vrot.slane %v697, 4
    %v699 = vmax.f32 %v697, %v698
    %v700 = vrot.slane %v699, 2
    %v701 = vmax.f32 %v699, %v700
    %v702 = vrot.slane %v701, 1
    %v703 = vmax.f32 %v701, %v702
    %v704 = vmax.f32 %v668, %v669
    %v705 = vrot.slane %v704, 4
    %v706 = vmax.f32 %v704, %v705
    %v707 = vrot.slane %v706, 2
    %v708 = vmax.f32 %v706, %v707
    %v709 = vrot.slane %v708, 1
    %v710 = vmax.f32 %v708, %v709
    %v711 = vmax.f32 %v670, %v671
    %v712 = vrot.slane %v711, 4
    %v713 = vmax.f32 %v711, %v712
    %v714 = vrot.slane %v713, 2
    %v715 = vmax.f32 %v713, %v714
    %v716 = vrot.slane %v715, 1
    %v717 = vmax.f32 %v715, %v716
    %v718 = vmax.f32 %v672, %v673
    %v719 = vrot.slane %v718, 4
    %v720 = vmax.f32 %v718, %v719
    %v721 = vrot.slane %v720, 2
    %v722 = vmax.f32 %v720, %v721
    %v723 = vrot.slane %v722, 1
    %v724 = vmax.f32 %v722, %v723
    %v725 = vmax.f32 %v674, %v675
    %v726 = vrot.slane %v725, 4
    %v727 = vmax.f32 %v725, %v726
    %v728 = vrot.slane %v727, 2
    %v729 = vmax.f32 %v727, %v728
    %v730 = vrot.slane %v729, 1
    %v731 = vmax.f32 %v729, %v730
    %v732 = vld [vmem:[%s3] sm:$0x1]
    %v734 = vlaneseq
    %v735 = vshrl.u32 %v734, 7
    %v736 = vsub.s32 0, %v735
    %v737 = vrot.slane %v732, %v736
    %v739 = vadd.f32 %v682, %v737
    %v740 = vadd.f32 %v689, %v737
    %v741 = vadd.f32 %v696, %v737
    %v742 = vadd.f32 %v703, %v737
    %v743 = vadd.f32 %v710, %v737
    %v744 = vadd.f32 %v717, %v737
    %v745 = vadd.f32 %v724, %v737
    %v746 = vadd.f32 %v731, %v737
    %v747 = vmax.f32 %v739, 0.0
    %v748 = vmax.f32 %v740, 0.0
    %v749 = vmax.f32 %v741, 0.0
    %v750 = vmax.f32 %v742, 0.0
    %v751 = vmax.f32 %v743, 0.0
    %v752 = vmax.f32 %v744, 0.0
    %v753 = vmax.f32 %v745, 0.0
    %v754 = vmax.f32 %v746, 0.0
    %v755 = vpack.c.bf16 %v747, %v747
    %v756 = vpack.c.bf16 %v748, %v748
    %v757 = vpack.c.bf16 %v749, %v749
    %v758 = vpack.c.bf16 %v750, %v750
    %v759 = vpack.c.bf16 %v751, %v751
    %v760 = vpack.c.bf16 %v752, %v752
    %v761 = vpack.c.bf16 %v753, %v753
    %v762 = vpack.c.bf16 %v754, %v754
    %v763 = vld [vmem:[#allocation8] sm:$0xf]
    %v764 = vld [vmem:[#allocation8 + $0x4] sm:$0xf]
    %v765 = vld [vmem:[#allocation8 + $0x8] sm:$0xf]
    %v766 = vld [vmem:[#allocation8 + $0xc] sm:$0xf]
    %v767 = vld [vmem:[#allocation8 + $0x10] sm:$0xf]
    %v768 = vld [vmem:[#allocation8 + $0x14] sm:$0xf]
    %v769 = vld [vmem:[#allocation8 + $0x18] sm:$0xf]
    %v770 = vld [vmem:[#allocation8 + $0x1c] sm:$0xf]
    %v771 = vld [vmem:[#allocation8 + $0x20] sm:$0xf]
    %v772 = vld [vmem:[#allocation8 + $0x24] sm:$0xf]
    %v773 = vld [vmem:[#allocation8 + $0x28] sm:$0xf]
    %v774 = vld [vmem:[#allocation8 + $0x2c] sm:$0xf]
    %v775 = vld [vmem:[#allocation8 + $0x30] sm:$0xf]
    %v776 = vld [vmem:[#allocation8 + $0x34] sm:$0xf]
    %v777 = vld [vmem:[#allocation8 + $0x38] sm:$0xf]
    %v778 = vld [vmem:[#allocation8 + $0x3c] sm:$0xf]
    %v779 = vld [vmem:[%s5] sm:$0x1]
    %v781 = vlaneseq
    %v782 = vshrl.u32 %v781, 7
    %v783 = vsub.s32 0, %v782
    %v784 = vrot.slane %v779, %v783
    %v794 = vunpack.c.l.b16 %v755
    %v795 = vunpack.c.l.b16 %v756
    %v796 = vunpack.c.l.b16 %v757
    %v797 = vunpack.c.l.b16 %v758
    %v798 = vunpack.c.l.b16 %v759
    %v799 = vunpack.c.l.b16 %v760
    %v800 = vunpack.c.l.b16 %v761
    %v801 = vunpack.c.l.b16 %v762
    %v802 = vrot.slane %v795, 7
    %vm803 = vcmask 1041409
    %v804 = vsel %vm803, %v802, %v794
    %v805 = vrot.slane %v796, 6
    %vm806 = vcmask 1042434
    %v807 = vsel %vm806, %v805, %v804
    %v808 = vrot.slane %v797, 5
    %vm809 = vcmask 1043459
    %v810 = vsel %vm809, %v808, %v807
    %v811 = vrot.slane %v798, 4
    %vm812 = vcmask 1044484
    %v813 = vsel %vm812, %v811, %v810
    %v814 = vrot.slane %v799, 3
    %vm815 = vcmask 1045509
    %v816 = vsel %vm815, %v814, %v813
    %v817 = vrot.slane %v800, 2
    %vm818 = vcmask 1046534
    %v819 = vsel %vm818, %v817, %v816
    %v820 = vrot.slane %v801, 1
    %vm821 = vcmask 1047559
    %v822 = vsel %vm821, %v820, %v819
    %v823 = vpack.c.b16 %v822, %v822
    %v841 = vunpack.c.l.b16 %v763
    %v842 = vunpack.c.l.b16 %v764
    %v843 = vunpack.c.l.b16 %v765
    %v844 = vunpack.c.l.b16 %v766
    %v845 = vunpack.c.l.b16 %v767
    %v846 = vunpack.c.l.b16 %v768
    %v847 = vunpack.c.l.b16 %v769
    %v848 = vunpack.c.l.b16 %v770
    %v849 = vunpack.c.l.b16 %v771
    %v850 = vunpack.c.l.b16 %v772
    %v851 = vunpack.c.l.b16 %v773
    %v852 = vunpack.c.l.b16 %v774
    %v853 = vunpack.c.l.b16 %v775
    %v854 = vunpack.c.l.b16 %v776
    %v855 = vunpack.c.l.b16 %v777
    %v856 = vunpack.c.l.b16 %v778
    %v857 = vpack.c.b16 %v842, %v841
    %v858 = vpack.c.b16 %v844, %v843
    %v859 = vpack.c.b16 %v846, %v845
    %v860 = vpack.c.b16 %v848, %v847
    %v861 = vpack.c.b16 %v850, %v849
    %v862 = vpack.c.b16 %v852, %v851
    %v863 = vpack.c.b16 %v854, %v853
    %v864 = vpack.c.b16 %v856, %v855
    %873 = vmatprep.subr.bf16.mxu0 0
    %874 = vmatpush1.bf16.msra.mxu0 %v864
    %875 = vmatprep.subr.bf16.mxu0 0
    %876 = vmatpush1.bf16.msra.mxu0 %v863
    %877 = vmatprep.subr.bf16.mxu0 0
    %878 = vmatpush1.bf16.msra.mxu0 %v862
    %879 = vmatprep.subr.bf16.mxu0 0
    %880 = vmatpush1.bf16.msra.mxu0 %v861
    %881 = vmatprep.subr.bf16.mxu0 0
    %882 = vmatpush1.bf16.msra.mxu0 %v860
    %883 = vmatprep.subr.bf16.mxu0 0
    %884 = vmatpush1.bf16.msra.mxu0 %v859
    %885 = vmatprep.subr.bf16.mxu0 0
    %886 = vmatpush1.bf16.msra.mxu0 %v858
    %887 = vmatprep.subr.bf16.mxu0 0
    %888 = vmatpush1.bf16.msra.mxu0 %v857
    %889 = vmatprep.subr.bf16.mxu0 0
    %890 = vmatpush2.bf16.msra.mxu0 0
    %891 = vmatprep.subr.bf16.mxu0 0
    %892 = vmatpush2.bf16.msra.mxu0 0
    %893 = vmatprep.subr.bf16.mxu0 0
    %894 = vmatpush2.bf16.msra.mxu0 0
    %895 = vmatprep.subr.bf16.mxu0 0
    %896 = vmatpush2.bf16.msra.mxu0 0
    %897 = vmatprep.subr.bf16.mxu0 0
    %898 = vmatpush2.bf16.msra.mxu0 0
    %899 = vmatprep.subr.bf16.mxu0 0
    %900 = vmatpush2.bf16.msra.mxu0 0
    %901 = vmatprep.subr.bf16.mxu0 0
    %902 = vmatpush2.bf16.msra.mxu0 0
    %903 = vmatprep.subr.bf16.mxu0 0
    %904 = vmatpush2.bf16.msra.mxu0 0
    %905 = vmatprep.mubr.bf16.mxu0 0
    %906 = vmatmul.mubr.bf16.gmra.mxu0 %v823
    %v907 = vpop.f32.mrf.mxu0
    %v908 = vadd.f32 %v784, %v907
    %v909 = vpop.f32.mrf.mxu0
    %v910 = vpop.f32.mrf.mxu0
    %v911 = vpop.f32.mrf.mxu0
    %912 = vdwg.mxu0
    %913 = vst [vmem:[#allocation10] sm:$0xff] %v908
    // Predicated region
    $region42: #{tpu_custom_call.1} parent=1 // pred_check
      _
    $region43: #{tpu_custom_call.1} parent=1 // pred_check_branch
      %915 = sbr.rel (0) target = $region45
    $region44: #{tpu_custom_call.1} parent=1 // pred_region
      %s917 = ssub.s32 128, 128
      %918 = vsyncadd [#allocation4], %s917
      %s920 = sshll.u32 [#allocation10], 4
      %s921 = int_to_ptr.vmem [resolvable:$true] %s920
      %923 = dma.vmem_to_hbm [thread:$0]  %s921, 128, %s6, [#allocation4]
    $region45: #{tpu_custom_call.1} parent=1 // pred_fallthru
      _
    // Predicated region
    $region46: #{tpu_custom_call.1} parent=1 // pred_check
      _
    $region47: #{tpu_custom_call.1} parent=1 // pred_check_branch
      %925 = sbr.rel (0) target = $region49
    $region48: #{tpu_custom_call.1} parent=1 // pred_region
      %926 = dma.done [#allocation4], 128
    $region49: #{tpu_custom_call.1} parent=1 // pred_fallthru
      _
    %927 = vsyncpa [#allocation3], 1
    %928 = vsyncpa [#allocation6], 1
    %929 = vsyncpa [#allocation9], 1
    %930 = vsyncpa [#allocation4], 1

</llo_original>
